<compile_context>
chip_gen: v5e
topology: v5e:2x2
jax: 0.10.0
libtpu: 0.0.40
codegen_flags: <defaults>
</compile_context>

<pallas_src>
import jax
import jax.numpy as jnp
from jax.experimental import pallas as pl
from jax.experimental.pallas import tpu as pltpu

STATE_DIM = 8
ACTION_DIM = 4
HIDDEN = 128
LANE = 128          # TPU lane width; output feature dim padded to this
MAX_TB = 1024       # batch tile upper bound (f32 out tile = 512 KB, trivial VMEM)


def _round_up(n, m):
    return ((n + m - 1) // m) * m


def _choose_tiling(B):
    """Pick (TB, B_pad). Tiny batches: single grid step. Larger batches: >=2
    steps so both v7x TensorCores get work; TB capped at MAX_TB."""
    B8 = _round_up(B, 8)                       # f32 sublane multiple of 8
    if B8 <= 64:
        TB = B8
    else:
        TB = min(MAX_TB, _round_up((B8 + 1) // 2, 8))
    B_pad = _round_up(B8, TB)
    return TB, B_pad


def dqn_kernel(x_ref, w1_ref, b1_ref, w2_ref, b2_ref, w3_ref, b3_ref, o_ref):
    # Fused 3-layer MLP on one (TB, ...) batch tile. Weights (bf16) are
    # VMEM-resident via constant index maps; activations stream over the grid.
    x = x_ref[...].astype(jnp.bfloat16)                                   # (TB, 8)
    h1 = jnp.dot(x, w1_ref[...], preferred_element_type=jnp.float32) + b1_ref[...]
    h1 = jnp.maximum(h1, 0.0).astype(jnp.bfloat16)                        # (TB, 128)
    h2 = jnp.dot(h1, w2_ref[...], preferred_element_type=jnp.float32) + b2_ref[...]
    h2 = jnp.maximum(h2, 0.0).astype(jnp.bfloat16)                        # (TB, 128)
    # Lane-dense (TB, 128) output -> unmasked vst; cols >= ACTION_DIM are 0.
    o_ref[...] = jnp.dot(h2, w3_ref[...], preferred_element_type=jnp.float32) + b3_ref[...]


def prepare_params(params):
    """One-time conversion of (in, out)-layout f32 params into kernel form:
    bf16 weights, w3/b3 zero-padded to a 128-lane output, biases kept f32."""
    w1 = params["w1"].astype(jnp.bfloat16)                               # (8, 128)
    w2 = params["w2"].astype(jnp.bfloat16)                               # (128, 128)
    w3 = (jnp.zeros((HIDDEN, LANE), jnp.float32)
          .at[:, :ACTION_DIM].set(params["w3"])).astype(jnp.bfloat16)    # (128, 128)
    b1 = params["b1"].astype(jnp.float32).reshape(1, HIDDEN)
    b2 = params["b2"].astype(jnp.float32).reshape(1, HIDDEN)
    b3 = (jnp.zeros((1, LANE), jnp.float32)
          .at[:, :ACTION_DIM].set(params["b3"].reshape(1, ACTION_DIM)))
    return {"w1": w1, "b1": b1, "w2": w2, "b2": b2, "w3": w3, "b3": b3}


def dqn_forward(x, kparams):
    """x: (B, STATE_DIM) float32; kparams: output of prepare_params."""
    B = x.shape[0]
    TB, B_pad = _choose_tiling(B)

    # Only batch-pad x (width stays STATE_DIM=8 -> no 16x lane-pad HBM traffic).
    if B_pad != B:
        x_p = jnp.zeros((B_pad, STATE_DIM), jnp.float32).at[:B, :].set(x)
    else:
        x_p = x

    const2 = lambda i: (0, 0)   # params: same block every grid step (VMEM-resident)

    out = pl.pallas_call(
        dqn_kernel,
        out_shape=jax.ShapeDtypeStruct((B_pad, LANE), jnp.float32),
        grid=(B_pad // TB,),
        in_specs=[
            pl.BlockSpec((TB, STATE_DIM), lambda i: (i, 0)),   # x tile (unpadded width)
            pl.BlockSpec((STATE_DIM, HIDDEN), const2),         # w1 bf16
            pl.BlockSpec((1, HIDDEN), const2),                 # b1 f32
            pl.BlockSpec((HIDDEN, HIDDEN), const2),            # w2 bf16
            pl.BlockSpec((1, HIDDEN), const2),                 # b2 f32
            pl.BlockSpec((HIDDEN, LANE), const2),              # w3 bf16 (padded)
            pl.BlockSpec((1, LANE), const2),                   # b3 f32 (padded)
        ],
        out_specs=pl.BlockSpec((TB, LANE), lambda i: (i, 0)),
        compiler_params=pltpu.CompilerParams(
            dimension_semantics=("parallel",),                 # 2-TC sharding on v7x
            vmem_limit_bytes=16 * 1024 * 1024,                 # safe on v7x 64 MiB VMEM
        ),
    )(x_p, kparams["w1"], kparams["b1"], kparams["w2"], kparams["b2"],
      kparams["w3"], kparams["b3"])

    return out[:B, :ACTION_DIM]


def init_params(key):
    """Deterministic synthetic init (shapes match the nn.Linear layers, stored (in, out))."""
    k1, k2, k3 = jax.random.split(key, 3)
    w1 = jax.random.normal(k1, (STATE_DIM, HIDDEN), jnp.float32) * 0.1
    w2 = jax.random.normal(k2, (HIDDEN, HIDDEN), jnp.float32) * 0.1
    w3 = jax.random.normal(k3, (HIDDEN, ACTION_DIM), jnp.float32) * 0.1
    b1 = jnp.zeros((1, HIDDEN), jnp.float32)
    b2 = jnp.zeros((1, HIDDEN), jnp.float32)
    b3 = jnp.zeros((1, ACTION_DIM), jnp.float32)
    return {"w1": w1, "b1": b1, "w2": w2, "b2": b2, "w3": w3, "b3": b3}


def dqn_reference(x, p):
    h1 = jnp.maximum(x @ p["w1"] + p["b1"], 0.0)
    h2 = jnp.maximum(h1 @ p["w2"] + p["b2"], 0.0)
    return h2 @ p["w3"] + p["b3"]


if __name__ == "__main__":
    key = jax.random.PRNGKey(0)
    kx, kp, kx2 = jax.random.split(key, 3)
    params = init_params(kp)
    kparams = prepare_params(params)   # one-time pad/cast, hoisted out of forward

    # Small online-inference batch (LunarLander observations) -> single grid step.
    B = 8
    x = jax.random.normal(kx, (B, STATE_DIM), jnp.float32)
    out = jax.block_until_ready(dqn_forward(x, kparams))
    ref = dqn_reference(x, params)
    assert out.shape == (B, ACTION_DIM), out.shape
    assert jnp.allclose(out, ref, atol=2e-2, rtol=2e-2), "mismatch vs reference (B=8)"

    # Replay-sized batch (non-multiple of the tile) -> 2 grid steps (megacore on v7x).
    B2 = 300
    x2 = jax.random.normal(kx2, (B2, STATE_DIM), jnp.float32)
    out2 = jax.block_until_ready(dqn_forward(x2, kparams))
    ref2 = dqn_reference(x2, params)
    assert out2.shape == (B2, ACTION_DIM), out2.shape
    assert jnp.allclose(out2, ref2, atol=2e-2, rtol=2e-2), "mismatch vs reference (B=300)"

    print("KERNEL_OK")
</pallas_src>

<mosaic_0001>
module attributes {stable_mosaic.version = 11 : i64} {
  func.func @dqn_kernel(%arg0: i32, %arg1: memref<8x8xf32, #tpu.memory_space<vmem>>, %arg2: memref<8x128xbf16, #tpu.memory_space<vmem>>, %arg3: memref<1x128xf32, #tpu.memory_space<vmem>>, %arg4: memref<128x128xbf16, #tpu.memory_space<vmem>>, %arg5: memref<1x128xf32, #tpu.memory_space<vmem>>, %arg6: memref<128x128xbf16, #tpu.memory_space<vmem>>, %arg7: memref<1x128xf32, #tpu.memory_space<vmem>>, %arg8: memref<8x128xf32, #tpu.memory_space<vmem>>) attributes {dimension_semantics = [#tpu.dimension_semantics<parallel>], iteration_bounds = array<i64: 1>, scalar_prefetch = 0 : i64, scratch_operands = 0 : i64, tpu.core_type = #tpu.core_type<tc>, window_params = [{transform_indices = @transform_0, window_bounds = array<i64: 8, 8>}, {pipeline_mode = #tpu.pipeline_mode<synchronous>, transform_indices = @transform_1, window_bounds = array<i64: 8, 128>}, {pipeline_mode = #tpu.pipeline_mode<synchronous>, transform_indices = @transform_2, window_bounds = array<i64: 1, 128>}, {pipeline_mode = #tpu.pipeline_mode<synchronous>, transform_indices = @transform_3, window_bounds = array<i64: 128, 128>}, {pipeline_mode = #tpu.pipeline_mode<synchronous>, transform_indices = @transform_4, window_bounds = array<i64: 1, 128>}, {pipeline_mode = #tpu.pipeline_mode<synchronous>, transform_indices = @transform_5, window_bounds = array<i64: 128, 128>}, {pipeline_mode = #tpu.pipeline_mode<synchronous>, transform_indices = @transform_6, window_bounds = array<i64: 1, 128>}, {transform_indices = @transform_7, window_bounds = array<i64: 8, 128>}]} {
    %c0 = arith.constant 0 : index
    %c0_0 = arith.constant 0 : index
    %0 = vector.load %arg1[%c0, %c0_0] : memref<8x8xf32, #tpu.memory_space<vmem>>, vector<8x8xf32>
    %1 = arith.truncf %0 : vector<8x8xf32> to vector<8x8xbf16>
    %c0_1 = arith.constant 0 : index
    %c0_2 = arith.constant 0 : index
    %2 = vector.load %arg2[%c0_1, %c0_2] : memref<8x128xbf16, #tpu.memory_space<vmem>>, vector<8x128xbf16>
    %cst = arith.constant dense<0.000000e+00> : vector<8x128xf32>
    %3 = tpu.matmul %1, %2, %cst {dimension_numbers = #tpu.dot_dimension_numbers<[1], [0], [0], [1], [0, 0, 1, 1], [], []>} : vector<8x8xbf16>, vector<8x128xbf16>, vector<8x128xf32> -> vector<8x128xf32>
    %c0_3 = arith.constant 0 : index
    %c0_4 = arith.constant 0 : index
    %4 = vector.load %arg3[%c0_3, %c0_4] : memref<1x128xf32, #tpu.memory_space<vmem>>, vector<1x128xf32>
    %5 = vector.broadcast %4 : vector<1x128xf32> to vector<8x128xf32>
    %6 = arith.addf %3, %5 : vector<8x128xf32>
    %cst_5 = arith.constant 0.000000e+00 : f32
    %7 = vector.broadcast %cst_5 : f32 to vector<8x128xf32>
    %8 = arith.maximumf %6, %7 : vector<8x128xf32>
    %9 = arith.truncf %8 : vector<8x128xf32> to vector<8x128xbf16>
    %c0_6 = arith.constant 0 : index
    %c0_7 = arith.constant 0 : index
    %10 = vector.load %arg4[%c0_6, %c0_7] : memref<128x128xbf16, #tpu.memory_space<vmem>>, vector<128x128xbf16>
    %cst_8 = arith.constant dense<0.000000e+00> : vector<8x128xf32>
    %11 = tpu.matmul %9, %10, %cst_8 {dimension_numbers = #tpu.dot_dimension_numbers<[1], [0], [0], [1], [0, 0, 1, 1], [], []>} : vector<8x128xbf16>, vector<128x128xbf16>, vector<8x128xf32> -> vector<8x128xf32>
    %c0_9 = arith.constant 0 : index
    %c0_10 = arith.constant 0 : index
    %12 = vector.load %arg5[%c0_9, %c0_10] : memref<1x128xf32, #tpu.memory_space<vmem>>, vector<1x128xf32>
    %13 = vector.broadcast %12 : vector<1x128xf32> to vector<8x128xf32>
    %14 = arith.addf %11, %13 : vector<8x128xf32>
    %cst_11 = arith.constant 0.000000e+00 : f32
    %15 = vector.broadcast %cst_11 : f32 to vector<8x128xf32>
    %16 = arith.maximumf %14, %15 : vector<8x128xf32>
    %17 = arith.truncf %16 : vector<8x128xf32> to vector<8x128xbf16>
    %c0_12 = arith.constant 0 : index
    %c0_13 = arith.constant 0 : index
    %18 = vector.load %arg6[%c0_12, %c0_13] : memref<128x128xbf16, #tpu.memory_space<vmem>>, vector<128x128xbf16>
    %cst_14 = arith.constant dense<0.000000e+00> : vector<8x128xf32>
    %19 = tpu.matmul %17, %18, %cst_14 {dimension_numbers = #tpu.dot_dimension_numbers<[1], [0], [0], [1], [0, 0, 1, 1], [], []>} : vector<8x128xbf16>, vector<128x128xbf16>, vector<8x128xf32> -> vector<8x128xf32>
    %c0_15 = arith.constant 0 : index
    %c0_16 = arith.constant 0 : index
    %20 = vector.load %arg7[%c0_15, %c0_16] : memref<1x128xf32, #tpu.memory_space<vmem>>, vector<1x128xf32>
    %21 = vector.broadcast %20 : vector<1x128xf32> to vector<8x128xf32>
    %22 = arith.addf %19, %21 : vector<8x128xf32>
    %c0_17 = arith.constant 0 : index
    %c0_18 = arith.constant 0 : index
    %23 = vector.load %arg8[%c0_17, %c0_18] : memref<8x128xf32, #tpu.memory_space<vmem>>, vector<8x128xf32>
    tpu.vector_store %arg8[%c0_17, %c0_18], %22 {strides = array<i32>} : memref<8x128xf32, #tpu.memory_space<vmem>>, vector<8x128xf32>,
    return
  }
  func.func @transform_0(%arg0: i32) -> (i32, i32) {
    %c0_i32 = arith.constant 0 : i32
    %c0_i32_0 = arith.constant 0 : i32
    return %arg0, %c0_i32 : i32, i32
  }
  func.func @transform_1(%arg0: i32) -> (i32, i32) {
    %c0_i32 = arith.constant 0 : i32
    %c0_i32_0 = arith.constant 0 : i32
    %c0_i32_1 = arith.constant 0 : i32
    return %c0_i32, %c0_i32_0 : i32, i32
  }
  func.func @transform_2(%arg0: i32) -> (i32, i32) {
    %c0_i32 = arith.constant 0 : i32
    %c0_i32_0 = arith.constant 0 : i32
    %c0_i32_1 = arith.constant 0 : i32
    return %c0_i32, %c0_i32_0 : i32, i32
  }
  func.func @transform_3(%arg0: i32) -> (i32, i32) {
    %c0_i32 = arith.constant 0 : i32
    %c0_i32_0 = arith.constant 0 : i32
    %c0_i32_1 = arith.constant 0 : i32
    return %c0_i32, %c0_i32_0 : i32, i32
  }
  func.func @transform_4(%arg0: i32) -> (i32, i32) {
    %c0_i32 = arith.constant 0 : i32
    %c0_i32_0 = arith.constant 0 : i32
    %c0_i32_1 = arith.constant 0 : i32
    return %c0_i32, %c0_i32_0 : i32, i32
  }
  func.func @transform_5(%arg0: i32) -> (i32, i32) {
    %c0_i32 = arith.constant 0 : i32
    %c0_i32_0 = arith.constant 0 : i32
    %c0_i32_1 = arith.constant 0 : i32
    return %c0_i32, %c0_i32_0 : i32, i32
  }
  func.func @transform_6(%arg0: i32) -> (i32, i32) {
    %c0_i32 = arith.constant 0 : i32
    %c0_i32_0 = arith.constant 0 : i32
    %c0_i32_1 = arith.constant 0 : i32
    return %c0_i32, %c0_i32_0 : i32, i32
  }
  func.func @transform_7(%arg0: i32) -> (i32, i32) {
    %c0_i32 = arith.constant 0 : i32
    %c0_i32_0 = arith.constant 0 : i32
    return %arg0, %c0_i32 : i32, i32
  }
}

</mosaic_0001>

<llo_original>
// kernel: tpu_custom_call.1
$region0: #{tpu_custom_call.1}
  #allocation0 [shape = 'u32[]', space=smem, size = 0x4, offset = 0x4, fixed_abs, tag = 'smem constant byte address 0x4 - core index']
  #allocation1 [shape = 'u32[72,128]{1,0:T(1,128)}', space=vmem, size = 0x9000, scoped, tag = 'internal scratch']
  %s0 = inlined_call_operand.hbm [shape: f32[8,8], index: 0, kind: input, shape index: {}]
  %s1 = inlined_call_operand.hbm [shape: bf16[8,128], index: 1, kind: input, shape index: {}]
  %s2 = inlined_call_operand.vmem [shape: f32[1,128], index: 2, kind: input, shape index: {}]
  %s3 = inlined_call_operand.hbm [shape: bf16[128,128], index: 3, kind: input, shape index: {}]
  %s4 = inlined_call_operand.vmem [shape: f32[1,128], index: 4, kind: input, shape index: {}]
  %s5 = inlined_call_operand.hbm [shape: bf16[128,128], index: 5, kind: input, shape index: {}]
  %s6 = inlined_call_operand.vmem [shape: f32[1,128], index: 6, kind: input, shape index: {}]
  %s7 = inlined_call_operand.hbm [shape: f32[8,128], index: 7, kind: output, shape index: {}]
  %s8 = sld [smem:[#allocation0]]
  $region54: #{tpu_custom_call.1} parent=0
    _
  %s10 = ssub.s32 1, %s8
  %s11 = scalar_select 0, %s10, %s8
  $region1: #{tpu_custom_call.1} parent=0
    #allocation2 [shape = 'u8[4096]{0}', space=vmem, size = 0x1000, scoped, tag = 'input window, operand 0, single buffered']
    #allocation3 [shape = 's32[1]{0}', space=sflag, size = 0x4, scoped, tag = 'scoped memory for tpu_custom_call.1']
    #allocation4 [shape = 's32[1]{0}', space=sflag, size = 0x4, scoped, tag = 'scoped memory for tpu_custom_call.1']
    #allocation5 [shape = 'u8[2048]{0}', space=vmem, size = 0x800, scoped, tag = 'input window, operand 1, single buffered']
    #allocation6 [shape = 's32[1]{0}', space=sflag, size = 0x4, scoped, tag = 'scoped memory for tpu_custom_call.1']
    #allocation7 [shape = 'u8[32768]{0}', space=vmem, size = 0x8000, scoped, tag = 'input window, operand 3, single buffered']
    #allocation8 [shape = 'u8[32768]{0}', space=vmem, size = 0x8000, scoped, tag = 'input window, operand 5, single buffered']
    #allocation9 [shape = 's32[1]{0}', space=sflag, size = 0x4, scoped, tag = 'scoped memory for tpu_custom_call.1']
    #allocation10 [shape = 'u8[4096]{0}', space=vmem, size = 0x1000, scoped, tag = 'output window, operand 0, single buffered']
    %12 = vsyncpa [#allocation3], 0
    %13 = vsyncpa [#allocation6], 0
    %14 = vsyncpa [#allocation9], 0
    %15 = vsyncpa [#allocation4], 0
    // Predicated region
    $region2: #{tpu_custom_call.1} parent=1 // pred_check
      _
    $region3: #{tpu_custom_call.1} parent=1 // pred_check_branch
      %17 = sbr.rel (0) target = $region5
    $region4: #{tpu_custom_call.1} parent=1 // pred_region
      %19 = vsyncadd [#allocation3], 0
      %s21 = sshll.u32 %s0, 4
      %s22 = int_to_ptr.hbm [resolvable:$true] %s21
      %s23 = sshll.u32 [#allocation2], 4
      %s24 = int_to_ptr.vmem [resolvable:$true] %s23
      %26 = dma.hbm_to_vmem [thread:$0]  %s22, 128, %s24, [#allocation3]
    $region5: #{tpu_custom_call.1} parent=1 // pred_fallthru
      _
    // Predicated region
    $region6: #{tpu_custom_call.1} parent=1 // pred_check
      _
    $region7: #{tpu_custom_call.1} parent=1 // pred_check_branch
      %28 = sbr.rel (0) target = $region9
    $region8: #{tpu_custom_call.1} parent=1 // pred_region
      %30 = vsyncadd [#allocation6], 0
      %s32 = sshll.u32 %s1, 4
      %s33 = int_to_ptr.hbm [resolvable:$true] %s32
      %s34 = sshll.u32 [#allocation5], 4
      %s35 = int_to_ptr.vmem [resolvable:$true] %s34
      %37 = dma.hbm_to_vmem [thread:$0]  %s33, 64, %s35, [#allocation6]
    $region9: #{tpu_custom_call.1} parent=1 // pred_fallthru
      _
    // Predicated region
    $region10: #{tpu_custom_call.1} parent=1 // pred_check
      _
    $region11: #{tpu_custom_call.1} parent=1 // pred_check_branch
      %39 = sbr.rel (0) target = $region13
    $region12: #{tpu_custom_call.1} parent=1 // pred_region
      _
    $region13: #{tpu_custom_call.1} parent=1 // pred_fallthru
      _
    // Predicated region
    $region14: #{tpu_custom_call.1} parent=1 // pred_check
      _
    $region15: #{tpu_custom_call.1} parent=1 // pred_check_branch
      %41 = sbr.rel (0) target = $region17
    $region16: #{tpu_custom_call.1} parent=1 // pred_region
      %43 = vsyncadd [#allocation6], 0
      %s44 = sshll.u32 %s3, 4
      %s45 = int_to_ptr.hbm [resolvable:$true] %s44
      %s46 = sshll.u32 [#allocation7], 4
      %s47 = int_to_ptr.vmem [resolvable:$true] %s46
      %52 = dma.hbm_to_vmem [thread:$0]  %s45, 1024, %s47, [#allocation6], 64, 64, 4
    $region17: #{tpu_custom_call.1} parent=1 // pred_fallthru
      _
    // Predicated region
    $region18: #{tpu_custom_call.1} parent=1 // pred_check
      _
    $region19: #{tpu_custom_call.1} parent=1 // pred_check_branch
      %54 = sbr.rel (0) target = $region21
    $region20: #{tpu_custom_call.1} parent=1 // pred_region
      _
    $region21: #{tpu_custom_call.1} parent=1 // pred_fallthru
      _
    // Predicated region
    $region22: #{tpu_custom_call.1} parent=1 // pred_check
      _
    $region23: #{tpu_custom_call.1} parent=1 // pred_check_branch
      %56 = sbr.rel (0) target = $region25
    $region24: #{tpu_custom_call.1} parent=1 // pred_region
      %58 = vsyncadd [#allocation9], 0
      %s59 = sshll.u32 %s5, 4
      %s60 = int_to_ptr.hbm [resolvable:$true] %s59
      %s61 = sshll.u32 [#allocation8], 4
      %s62 = int_to_ptr.vmem [resolvable:$true] %s61
      %67 = dma.hbm_to_vmem [thread:$0]  %s60, 1024, %s62, [#allocation9], 64, 64, 4
    $region25: #{tpu_custom_call.1} parent=1 // pred_fallthru
      _
    // Predicated region
    $region26: #{tpu_custom_call.1} parent=1 // pred_check
      _
    $region27: #{tpu_custom_call.1} parent=1 // pred_check_branch
      %69 = sbr.rel (0) target = $region29
    $region28: #{tpu_custom_call.1} parent=1 // pred_region
      _
    $region29: #{tpu_custom_call.1} parent=1 // pred_fallthru
      _
    // Predicated region
    $region30: #{tpu_custom_call.1} parent=1 // pred_check
      _
    $region31: #{tpu_custom_call.1} parent=1 // pred_check_branch
      %71 = sbr.rel (0) target = $region33
    $region32: #{tpu_custom_call.1} parent=1 // pred_region
      %73 = dma.done [#allocation3], 128
    $region33: #{tpu_custom_call.1} parent=1 // pred_fallthru
      _
    // Predicated region
    $region34: #{tpu_custom_call.1} parent=1 // pred_check
      _
    $region35: #{tpu_custom_call.1} parent=1 // pred_check_branch
      %75 = sbr.rel (0) target = $region37
    $region36: #{tpu_custom_call.1} parent=1 // pred_region
      %77 = dma.done [#allocation6], 64
    $region37: #{tpu_custom_call.1} parent=1 // pred_fallthru
      _
    // Predicated region
    $region38: #{tpu_custom_call.1} parent=1 // pred_check
      _
    $region39: #{tpu_custom_call.1} parent=1 // pred_check_branch
      %79 = sbr.rel (0) target = $region41
    $region40: #{tpu_custom_call.1} parent=1 // pred_region
      %81 = dma.done [#allocation6], 1024
    $region41: #{tpu_custom_call.1} parent=1 // pred_fallthru
      _
    // Predicated region
    $region42: #{tpu_custom_call.1} parent=1 // pred_check
      _
    $region43: #{tpu_custom_call.1} parent=1 // pred_check_branch
      %83 = sbr.rel (0) target = $region45
    $region44: #{tpu_custom_call.1} parent=1 // pred_region
      %85 = dma.done [#allocation9], 1024
    $region45: #{tpu_custom_call.1} parent=1 // pred_fallthru
      _
    %v87 = vld [vmem:[#allocation2] sm:$0xff]
    %v88 = vpack.c.bf16 %v87, %v87
    %v89 = vld [vmem:[#allocation5] sm:$0xf]
    %v90 = vld [vmem:[%s2] sm:$0x1]
    %v92 = vperm.slane %v90, 0
    %vm94 = vcmask 64512
    %v96 = vsel %vm94, %v88, 0
    %vm98 = vcmask 1043456
    %v100 = vsel %vm98, %v89, 0
    %102 = vmatpush.bf16.msra.mxu0 0
    %103 = vmatpush.bf16.msra.mxu0 0
    %104 = vmatpush.bf16.msra.mxu0 0
    %105 = vmatpush.bf16.msra.mxu0 0
    %106 = vmatpush.bf16.msra.mxu0 0
    %107 = vmatpush.bf16.msra.mxu0 0
    %108 = vmatpush.bf16.msra.mxu0 0
    %109 = vmatpush.bf16.msra.mxu0 %v100
    %110 = vmatmul.bf16.gmra.mxu0 %v96
    %v111 = vpop.f32.mrf.mxu0
    %v112 = vadd.f32 %v92, %v111
    %v113 = vpop.f32.mrf.mxu0
    %114 = vdwg.mxu0
    %v115 = vmax.f32 %v112, 0.0
    %v116 = vpack.c.bf16 %v115, %v115
    %v117 = vld [vmem:[#allocation7] sm:$0xf]
    %v118 = vld [vmem:[#allocation7 + $0x4] sm:$0xf]
    %v119 = vld [vmem:[#allocation7 + $0x8] sm:$0xf]
    %v120 = vld [vmem:[#allocation7 + $0xc] sm:$0xf]
    %v121 = vld [vmem:[#allocation7 + $0x10] sm:$0xf]
    %v122 = vld [vmem:[#allocation7 + $0x14] sm:$0xf]
    %v123 = vld [vmem:[#allocation7 + $0x18] sm:$0xf]
    %v124 = vld [vmem:[#allocation7 + $0x1c] sm:$0xf]
    %v125 = vld [vmem:[#allocation7 + $0x20] sm:$0xf]
    %v126 = vld [vmem:[#allocation7 + $0x24] sm:$0xf]
    %v127 = vld [vmem:[#allocation7 + $0x28] sm:$0xf]
    %v128 = vld [vmem:[#allocation7 + $0x2c] sm:$0xf]
    %v129 = vld [vmem:[#allocation7 + $0x30] sm:$0xf]
    %v130 = vld [vmem:[#allocation7 + $0x34] sm:$0xf]
    %v131 = vld [vmem:[#allocation7 + $0x38] sm:$0xf]
    %v132 = vld [vmem:[#allocation7 + $0x3c] sm:$0xf]
    %v133 = vld [vmem:[%s4] sm:$0x1]
    %v135 = vperm.slane %v133, 0
    %v153 = vunpack.c.l.b16 %v117
    %v154 = vunpack.c.l.b16 %v118
    %v155 = vunpack.c.l.b16 %v119
    %v156 = vunpack.c.l.b16 %v120
    %v157 = vunpack.c.l.b16 %v121
    %v158 = vunpack.c.l.b16 %v122
    %v159 = vunpack.c.l.b16 %v123
    %v160 = vunpack.c.l.b16 %v124
    %v161 = vunpack.c.l.b16 %v125
    %v162 = vunpack.c.l.b16 %v126
    %v163 = vunpack.c.l.b16 %v127
    %v164 = vunpack.c.l.b16 %v128
    %v165 = vunpack.c.l.b16 %v129
    %v166 = vunpack.c.l.b16 %v130
    %v167 = vunpack.c.l.b16 %v131
    %v168 = vunpack.c.l.b16 %v132
    %v169 = vpack.c.b16 %v154, %v153
    %v170 = vpack.c.b16 %v156, %v155
    %v171 = vpack.c.b16 %v158, %v157
    %v172 = vpack.c.b16 %v160, %v159
    %v173 = vpack.c.b16 %v162, %v161
    %v174 = vpack.c.b16 %v164, %v163
    %v175 = vpack.c.b16 %v166, %v165
    %v176 = vpack.c.b16 %v168, %v167
    %185 = vmatpush.bf16.msra.mxu0 %v176
    %186 = vmatpush.bf16.msra.mxu0 %v175
    %187 = vmatpush.bf16.msra.mxu0 %v174
    %188 = vmatpush.bf16.msra.mxu0 %v173
    %189 = vmatpush.bf16.msra.mxu0 %v172
    %190 = vmatpush.bf16.msra.mxu0 %v171
    %191 = vmatpush.bf16.msra.mxu0 %v170
    %192 = vmatpush.bf16.msra.mxu0 %v169
    %193 = vmatmul.bf16.gmra.mxu0 %v116
    %v194 = vpop.f32.mrf.mxu0
    %v195 = vadd.f32 %v135, %v194
    %v196 = vpop.f32.mrf.mxu0
    %197 = vdwg.mxu0
    %v198 = vmax.f32 %v195, 0.0
    %v199 = vpack.c.bf16 %v198, %v198
    %v200 = vld [vmem:[#allocation8] sm:$0xf]
    %v201 = vld [vmem:[#allocation8 + $0x4] sm:$0xf]
    %v202 = vld [vmem:[#allocation8 + $0x8] sm:$0xf]
    %v203 = vld [vmem:[#allocation8 + $0xc] sm:$0xf]
    %v204 = vld [vmem:[#allocation8 + $0x10] sm:$0xf]
    %v205 = vld [vmem:[#allocation8 + $0x14] sm:$0xf]
    %v206 = vld [vmem:[#allocation8 + $0x18] sm:$0xf]
    %v207 = vld [vmem:[#allocation8 + $0x1c] sm:$0xf]
    %v208 = vld [vmem:[#allocation8 + $0x20] sm:$0xf]
    %v209 = vld [vmem:[#allocation8 + $0x24] sm:$0xf]
    %v210 = vld [vmem:[#allocation8 + $0x28] sm:$0xf]
    %v211 = vld [vmem:[#allocation8 + $0x2c] sm:$0xf]
    %v212 = vld [vmem:[#allocation8 + $0x30] sm:$0xf]
    %v213 = vld [vmem:[#allocation8 + $0x34] sm:$0xf]
    %v214 = vld [vmem:[#allocation8 + $0x38] sm:$0xf]
    %v215 = vld [vmem:[#allocation8 + $0x3c] sm:$0xf]
    %v216 = vld [vmem:[%s6] sm:$0x1]
    %v218 = vperm.slane %v216, 0
    %v236 = vunpack.c.l.b16 %v200
    %v237 = vunpack.c.l.b16 %v201
    %v238 = vunpack.c.l.b16 %v202
    %v239 = vunpack.c.l.b16 %v203
    %v240 = vunpack.c.l.b16 %v204
    %v241 = vunpack.c.l.b16 %v205
    %v242 = vunpack.c.l.b16 %v206
    %v243 = vunpack.c.l.b16 %v207
    %v244 = vunpack.c.l.b16 %v208
    %v245 = vunpack.c.l.b16 %v209
    %v246 = vunpack.c.l.b16 %v210
    %v247 = vunpack.c.l.b16 %v211
    %v248 = vunpack.c.l.b16 %v212
    %v249 = vunpack.c.l.b16 %v213
    %v250 = vunpack.c.l.b16 %v214
    %v251 = vunpack.c.l.b16 %v215
    %v252 = vpack.c.b16 %v237, %v236
    %v253 = vpack.c.b16 %v239, %v238
    %v254 = vpack.c.b16 %v241, %v240
    %v255 = vpack.c.b16 %v243, %v242
    %v256 = vpack.c.b16 %v245, %v244
    %v257 = vpack.c.b16 %v247, %v246
    %v258 = vpack.c.b16 %v249, %v248
    %v259 = vpack.c.b16 %v251, %v250
    %268 = vmatpush.bf16.msra.mxu0 %v259
    %269 = vmatpush.bf16.msra.mxu0 %v258
    %270 = vmatpush.bf16.msra.mxu0 %v257
    %271 = vmatpush.bf16.msra.mxu0 %v256
    %272 = vmatpush.bf16.msra.mxu0 %v255
    %273 = vmatpush.bf16.msra.mxu0 %v254
    %274 = vmatpush.bf16.msra.mxu0 %v253
    %275 = vmatpush.bf16.msra.mxu0 %v252
    %276 = vmatmul.bf16.gmra.mxu0 %v199
    %v277 = vpop.f32.mrf.mxu0
    %v278 = vadd.f32 %v218, %v277
    %v279 = vpop.f32.mrf.mxu0
    %280 = vdwg.mxu0
    %281 = vst [vmem:[#allocation10] sm:$0xff] %v278
    // Predicated region
    $region46: #{tpu_custom_call.1} parent=1 // pred_check
      _
    $region47: #{tpu_custom_call.1} parent=1 // pred_check_branch
      %283 = sbr.rel (0) target = $region49
    $region48: #{tpu_custom_call.1} parent=1 // pred_region
      %285 = vsyncadd [#allocation4], 0
      %s287 = sshll.u32 [#allocation10], 4
      %s288 = int_to_ptr.vmem [resolvable:$true] %s287
      %s289 = sshll.u32 %s7, 4
      %s290 = int_to_ptr.hbm [resolvable:$true] %s289
      %292 = dma.vmem_to_hbm [thread:$0]  %s288, 128, %s290, [#allocation4]
    $region49: #{tpu_custom_call.1} parent=1 // pred_fallthru
      _
    // Predicated region
    $region50: #{tpu_custom_call.1} parent=1 // pred_check
      _
    $region51: #{tpu_custom_call.1} parent=1 // pred_check_branch
      %294 = sbr.rel (0) target = $region53
    $region52: #{tpu_custom_call.1} parent=1 // pred_region
      %296 = dma.done [#allocation4], 128
    $region53: #{tpu_custom_call.1} parent=1 // pred_fallthru
      _
    %297 = vsyncpa [#allocation3], 1
    %298 = vsyncpa [#allocation6], 1
    %299 = vsyncpa [#allocation9], 1
    %300 = vsyncpa [#allocation4], 1

</llo_original>
